<compile_context>
chip_gen: v7x
topology: tpu7x:2x2x1
jax: 0.10.0
libtpu: 0.0.40
codegen_flags: <defaults>
</compile_context>

<pallas_src>
import functools

import jax
import jax.numpy as jnp
from jax import lax
from jax.experimental import pallas as pl
from jax.experimental.pallas import tpu as pltpu

BN_EPS = 1e-5
LANE = 128


def _encoder_to_laplace_kernel(h_ref, w_ref, out_ref, *, num_topics):
    # One fused MXU matmul for both heads: [B, H] @ [H, P] (P = 128-padded 2K).
    y = jnp.dot(h_ref[...], w_ref[...], preferred_element_type=jnp.float32)

    # Single-pass BatchNorm1d(affine=False), training mode, per feature column.
    # The two cross-sublane reductions (mean, mean of squares) are independent.
    mean = jnp.mean(y, axis=0, keepdims=True)
    mean_sq = jnp.mean(y * y, axis=0, keepdims=True)
    var = jnp.maximum(mean_sq - mean * mean, 0.0)   # biased var, clamped >= 0
    y_bn = (y - mean) * lax.rsqrt(var + BN_EPS)

    # Fused epilogue over one lane-dense slab: loc for cols [0, K), exp(0.5*BN)
    # for cols [K, P).  Column mask avoids any cross-lane slice/concat; padded
    # columns produce exp(0) = 1 and are sliced off by the wrapper.
    B, P = out_ref.shape
    col = lax.broadcasted_iota(jnp.int32, (B, P), 1)
    out_ref[...] = jnp.where(col < num_topics, y_bn, jnp.exp(0.5 * y_bn))


def fuse_head_params(w_lambda, w_k):
    """Precompute ONCE at parameter-init time (outside the per-step hot path).

    Concatenates the two linear heads into a single [H, P] weight, zero-padded
    along features to a multiple of 128 lanes.  Biases are intentionally NOT
    fused: they cancel under the affine=False, training-mode BatchNorm.
    """
    H, K = w_lambda.shape
    P = ((2 * K + LANE - 1) // LANE) * LANE
    w_cat = jnp.concatenate([w_lambda, w_k], axis=1)          # [H, 2K]
    w_fused = jnp.pad(w_cat, ((0, 0), (0, P - 2 * K)))         # [H, P]
    return w_fused


def encoder_to_laplace(hidden, w_fused, num_topics):
    """Returns (loc, scale) of the Laplace distribution.

    hidden:   [B, H]  float32
    w_fused:  [H, P]  float32, from fuse_head_params (P = 128-padded 2*K)
    """
    B, _ = hidden.shape
    P = w_fused.shape[1]

    vmem = pl.BlockSpec(memory_space=pltpu.MemorySpace.VMEM)

    out = pl.pallas_call(
        functools.partial(_encoder_to_laplace_kernel, num_topics=num_topics),
        out_shape=jax.ShapeDtypeStruct((B, P), jnp.float32),
        in_specs=[vmem, vmem],
        out_specs=vmem,
    )(hidden, w_fused)

    loc = out[:, :num_topics]
    scale = out[:, num_topics:2 * num_topics]
    return loc, scale


def _reference(hidden, w_lambda, b_lambda, w_k, b_k):
    """Pure-JAX reference of the PyTorch forward (WITH biases)."""
    def bn(y):
        mean = jnp.mean(y, axis=0, keepdims=True)
        var = jnp.mean((y - mean) ** 2, axis=0, keepdims=True)
        return (y - mean) / jnp.sqrt(var + BN_EPS)

    loc = bn(hidden @ w_lambda + b_lambda)
    scale = jnp.exp(0.5 * bn(hidden @ w_k + b_k))
    return loc, scale


if __name__ == "__main__":
    # Small shapes implied by the module: hidden_size[2] = 32, num_topics = 16.
    B, H, K = 8, 32, 16

    key = jax.random.PRNGKey(0)
    k_h, k_wl, k_bl, k_wk, k_bk = jax.random.split(key, 5)

    hidden = jax.random.normal(k_h, (B, H), dtype=jnp.float32)

    # Deterministic parameter init (PyTorch-style uniform bound 1/sqrt(H)).
    bound = 1.0 / jnp.sqrt(jnp.float32(H))
    w_lambda = jax.random.uniform(k_wl, (H, K), jnp.float32, -bound, bound)
    b_lambda = jax.random.uniform(k_bl, (1, K), jnp.float32, -bound, bound)
    w_k = jax.random.uniform(k_wk, (H, K), jnp.float32, -bound, bound)
    b_k = jax.random.uniform(k_bk, (1, K), jnp.float32, -bound, bound)

    # One-time parameter fusion (init-time, not per-step).
    w_fused = jax.block_until_ready(fuse_head_params(w_lambda, w_k))

    loc, scale = encoder_to_laplace(hidden, w_fused, K)
    jax.block_until_ready((loc, scale))

    # Reference includes the biases — proves the bias cancellation under
    # affine=False training-mode BatchNorm.
    loc_ref, scale_ref = _reference(hidden, w_lambda, b_lambda, w_k, b_k)
    assert loc.shape == (B, K) and scale.shape == (B, K)
    assert jnp.allclose(loc, loc_ref, atol=1e-4, rtol=1e-4)
    assert jnp.allclose(scale, scale_ref, atol=1e-4, rtol=1e-4)
    assert bool(jnp.all(scale > 0))  # Laplace requires positive scale

    print("KERNEL_OK")
</pallas_src>

<mosaic_0001>
module attributes {stable_mosaic.version = 11 : i64} {
  func.func @_encoder_to_laplace_kernel(%arg0: memref<8x32xf32, #tpu.memory_space<vmem>>, %arg1: memref<32x128xf32, #tpu.memory_space<vmem>>, %arg2: memref<8x128xf32, #tpu.memory_space<vmem>>) attributes {dimension_semantics = [], scalar_prefetch = 0 : i64, scratch_operands = 0 : i64, tpu.core_type = #tpu.core_type<tc>} {
    %c0 = arith.constant 0 : index
    %c0_0 = arith.constant 0 : index
    %0 = vector.load %arg0[%c0, %c0_0] : memref<8x32xf32, #tpu.memory_space<vmem>>, vector<8x32xf32>
    %c0_1 = arith.constant 0 : index
    %c0_2 = arith.constant 0 : index
    %1 = vector.load %arg1[%c0_1, %c0_2] : memref<32x128xf32, #tpu.memory_space<vmem>>, vector<32x128xf32>
    %cst = arith.constant dense<0.000000e+00> : vector<8x128xf32>
    %2 = tpu.matmul %0, %1, %cst {dimension_numbers = #tpu.dot_dimension_numbers<[1], [0], [0], [1], [0, 0, 1, 1], [], []>} : vector<8x32xf32>, vector<32x128xf32>, vector<8x128xf32> -> vector<8x128xf32>
    %cst_3 = arith.constant dense<0.000000e+00> : vector<128xf32>
    %3 = vector.multi_reduction <add>, %2, %cst_3 [0] : vector<8x128xf32> to vector<128xf32>
    %4 = vector.shape_cast %3 : vector<128xf32> to vector<1x128xf32>
    %cst_4 = arith.constant 8.000000e+00 : f32
    %5 = vector.broadcast %cst_4 : f32 to vector<1x128xf32>
    %6 = arith.divf %4, %5 : vector<1x128xf32>
    %7 = arith.mulf %2, %2 : vector<8x128xf32>
    %cst_5 = arith.constant dense<0.000000e+00> : vector<128xf32>
    %8 = vector.multi_reduction <add>, %7, %cst_5 [0] : vector<8x128xf32> to vector<128xf32>
    %9 = vector.shape_cast %8 : vector<128xf32> to vector<1x128xf32>
    %cst_6 = arith.constant 8.000000e+00 : f32
    %10 = vector.broadcast %cst_6 : f32 to vector<1x128xf32>
    %11 = arith.divf %9, %10 : vector<1x128xf32>
    %12 = arith.mulf %6, %6 : vector<1x128xf32>
    %13 = arith.subf %11, %12 : vector<1x128xf32>
    %cst_7 = arith.constant 0.000000e+00 : f32
    %14 = vector.broadcast %cst_7 : f32 to vector<1x128xf32>
    %15 = arith.maximumf %13, %14 : vector<1x128xf32>
    %16 = vector.broadcast %6 : vector<1x128xf32> to vector<8x128xf32>
    %17 = arith.subf %2, %16 : vector<8x128xf32>
    %cst_8 = arith.constant 9.99999974E-6 : f32
    %18 = vector.broadcast %cst_8 : f32 to vector<1x128xf32>
    %19 = arith.addf %15, %18 : vector<1x128xf32>
    %20 = math.rsqrt %19 : vector<1x128xf32>
    %21 = vector.broadcast %20 : vector<1x128xf32> to vector<8x128xf32>
    %22 = arith.mulf %17, %21 : vector<8x128xf32>
    %23 = tpu.iota {dimensions = array<i32: 1>} : vector<8x128xi32>
    %c16_i32 = arith.constant 16 : i32
    %24 = vector.broadcast %c16_i32 : i32 to vector<8x128xi32>
    %25 = arith.cmpi slt, %23, %24 : vector<8x128xi32>
    %cst_9 = arith.constant 5.000000e-01 : f32
    %26 = vector.broadcast %cst_9 : f32 to vector<8x128xf32>
    %27 = arith.mulf %26, %22 : vector<8x128xf32>
    %28 = math.exp %27 : vector<8x128xf32>
    %29 = arith.select %25, %22, %28 : vector<8x128xi1>, vector<8x128xf32>
    %c0_10 = arith.constant 0 : index
    %c0_11 = arith.constant 0 : index
    %30 = vector.load %arg2[%c0_10, %c0_11] : memref<8x128xf32, #tpu.memory_space<vmem>>, vector<8x128xf32>
    tpu.vector_store %arg2[%c0_10, %c0_11], %29 {strides = array<i32>} : memref<8x128xf32, #tpu.memory_space<vmem>>, vector<8x128xf32>,
    return
  }
}

</mosaic_0001>

<llo_original>
// kernel: tpu_custom_call.1
$region0: #{tpu_custom_call.1}
  #allocation0 [shape = 'u32[]', space=smem, size = 0x4, offset = 0x4, fixed_abs, tag = 'smem constant byte address 0x4 - core index']
  #allocation1 [shape = 'u32[144,128]{1,0:T(1,128)}', space=vmem, size = 0x12000, scoped, tag = 'internal scratch']
  %s0 = inlined_call_operand.hbm [shape: f32[8,32], index: 0, kind: input, shape index: {}]
  %s1 = inlined_call_operand.hbm [shape: f32[32,128], index: 1, kind: input, shape index: {}]
  %s2 = inlined_call_operand.hbm [shape: f32[8,128], index: 2, kind: output, shape index: {}]
  %s3 = sld [smem:[#allocation0]]
  $region26: #{tpu_custom_call.1} parent=0
    _
  %s5 = ssub.s32 1, %s3
  %s6 = scalar_select 0, %s5, %s3
  $region1: #{tpu_custom_call.1} parent=0
    #allocation2 [shape = 'u8[4096]{0}', space=vmem, size = 0x1000, scoped, tag = 'input window, operand 0, single buffered']
    #allocation3 [shape = 's32[1]{0}', space=sflag, size = 0x4, scoped, tag = 'scoped memory for tpu_custom_call.1']
    #allocation4 [shape = 's32[1]{0}', space=sflag, size = 0x4, scoped, tag = 'scoped memory for tpu_custom_call.1']
    #allocation5 [shape = 'u8[16384]{0}', space=vmem, size = 0x4000, scoped, tag = 'input window, operand 1, single buffered']
    #allocation6 [shape = 's32[1]{0}', space=sflag, size = 0x4, scoped, tag = 'scoped memory for tpu_custom_call.1']
    #allocation7 [shape = 'u8[4096]{0}', space=vmem, size = 0x1000, scoped, tag = 'output window, operand 0, single buffered']
    %7 = vsyncpa [#allocation3], 0
    %8 = vsyncpa [#allocation6], 0
    %9 = vsyncpa [#allocation4], 0
    // Predicated region
    $region2: #{tpu_custom_call.1} parent=1 // pred_check
      _
    $region3: #{tpu_custom_call.1} parent=1 // pred_check_branch
      %11 = sbr.rel (0) target = $region5
    $region4: #{tpu_custom_call.1} parent=1 // pred_region
      %s13 = ssub.s32 128, 128
      %14 = vsyncadd [#allocation3], %s13
      %s16 = sshll.u32 [#allocation2], 4
      %s17 = int_to_ptr.vmem [resolvable:$true] %s16
      %19 = dma.hbm_to_vmem [thread:$0]  %s0, 128, %s17, [#allocation3]
    $region5: #{tpu_custom_call.1} parent=1 // pred_fallthru
      _
    // Predicated region
    $region6: #{tpu_custom_call.1} parent=1 // pred_check
      _
    $region7: #{tpu_custom_call.1} parent=1 // pred_check_branch
      %21 = sbr.rel (0) target = $region9
    $region8: #{tpu_custom_call.1} parent=1 // pred_region
      %s23 = ssub.s32 512, 512
      %24 = vsyncadd [#allocation6], %s23
      %s25 = sshll.u32 [#allocation5], 4
      %s26 = int_to_ptr.vmem [resolvable:$true] %s25
      %31 = dma.hbm_to_vmem [thread:$0]  %s1, 512, %s26, [#allocation6], 128, 128, 8
    $region9: #{tpu_custom_call.1} parent=1 // pred_fallthru
      _
    // Predicated region
    $region10: #{tpu_custom_call.1} parent=1 // pred_check
      _
    $region11: #{tpu_custom_call.1} parent=1 // pred_check_branch
      %33 = sbr.rel (0) target = $region13
    $region12: #{tpu_custom_call.1} parent=1 // pred_region
      %34 = dma.done [#allocation3], 128
    $region13: #{tpu_custom_call.1} parent=1 // pred_fallthru
      _
    // Predicated region
    $region14: #{tpu_custom_call.1} parent=1 // pred_check
      _
    $region15: #{tpu_custom_call.1} parent=1 // pred_check_branch
      %36 = sbr.rel (0) target = $region17
    $region16: #{tpu_custom_call.1} parent=1 // pred_region
      %37 = dma.done [#allocation6], 512
    $region17: #{tpu_custom_call.1} parent=1 // pred_fallthru
      _
    %v38 = vld [vmem:[#allocation2] sm:$0xff]
    %v39 = vld [vmem:[#allocation5] sm:$0xff]
    %v40 = vld [vmem:[#allocation5 + $0x8] sm:$0xff]
    %v41 = vld [vmem:[#allocation5 + $0x10] sm:$0xff]
    %v42 = vld [vmem:[#allocation5 + $0x18] sm:$0xff]
    %vm43 = vcmask 261120
    %v45 = vsel %vm43, %v38, 0
    %47 = vmatprep.subr.mxu0 0.0
    %48 = vmatpush1.msra.mxu0 %v39
    %49 = vmatprep.subr.mxu0 0.0
    %50 = vmatpush1.msra.mxu0 %v40
    %51 = vmatprep.subr.mxu0 0.0
    %52 = vmatpush1.msra.mxu0 %v41
    %53 = vmatprep.subr.mxu0 0.0
    %54 = vmatpush1.msra.mxu0 %v42
    %55 = vmatprep.subr.mxu0 0.0
    %56 = vmatpush1.msra.mxu0 0.0
    %57 = vmatprep.subr.mxu0 0.0
    %58 = vmatpush1.msra.mxu0 0.0
    %59 = vmatprep.subr.mxu0 0.0
    %60 = vmatpush1.msra.mxu0 0.0
    %61 = vmatprep.subr.mxu0 0.0
    %62 = vmatpush1.msra.mxu0 0.0
    %63 = vmatprep.subr.mxu0 0.0
    %64 = vmatpush1.msra.mxu0 0.0
    %65 = vmatprep.subr.mxu0 0.0
    %66 = vmatpush1.msra.mxu0 0.0
    %67 = vmatprep.subr.mxu0 0.0
    %68 = vmatpush1.msra.mxu0 0.0
    %69 = vmatprep.subr.mxu0 0.0
    %70 = vmatpush1.msra.mxu0 0.0
    %71 = vmatprep.subr.mxu0 0.0
    %72 = vmatpush1.msra.mxu0 0.0
    %73 = vmatprep.subr.mxu0 0.0
    %74 = vmatpush1.msra.mxu0 0.0
    %75 = vmatprep.subr.mxu0 0.0
    %76 = vmatpush1.msra.mxu0 0.0
    %77 = vmatprep.subr.mxu0 0.0
    %78 = vmatpush1.msra.mxu0 0.0
    %79 = vmatprep.subr.mxu0 0.0
    %80 = vmatpush1.msra.mxu0 0.0
    %81 = vmatprep.subr.mxu0 0.0
    %82 = vmatpush1.msra.mxu0 0.0
    %83 = vmatprep.subr.mxu0 0.0
    %84 = vmatpush1.msra.mxu0 0.0
    %85 = vmatprep.subr.mxu0 0.0
    %86 = vmatpush1.msra.mxu0 0.0
    %87 = vmatprep.subr.mxu0 0.0
    %88 = vmatpush1.msra.mxu0 0.0
    %89 = vmatprep.subr.mxu0 0.0
    %90 = vmatpush1.msra.mxu0 0.0
    %91 = vmatprep.subr.mxu0 0.0
    %92 = vmatpush1.msra.mxu0 0.0
    %93 = vmatprep.subr.mxu0 0.0
    %94 = vmatpush1.msra.mxu0 0.0
    %95 = vmatprep.subr.mxu0 0.0
    %96 = vmatpush1.msra.mxu0 0.0
    %97 = vmatprep.subr.mxu0 0.0
    %98 = vmatpush1.msra.mxu0 0.0
    %99 = vmatprep.subr.mxu0 0.0
    %100 = vmatpush1.msra.mxu0 0.0
    %101 = vmatprep.subr.mxu0 0.0
    %102 = vmatpush1.msra.mxu0 0.0
    %103 = vmatprep.subr.mxu0 0.0
    %104 = vmatpush1.msra.mxu0 0.0
    %105 = vmatprep.subr.mxu0 0.0
    %106 = vmatpush1.msra.mxu0 0.0
    %107 = vmatprep.subr.mxu0 0.0
    %108 = vmatpush1.msra.mxu0 0.0
    %109 = vmatprep.subr.mxu0 0.0
    %110 = vmatpush1.msra.mxu0 0.0
    %111 = vmatprep.mubr.f32.mxu0 0.0
    %112 = vmatmul.mubr.f32.gmra.mrb[0].mxu0 %v45
    %v113 = vpop.f32.mrb[0].mxu0
    %v114 = vadd.f32 0.0, %v113
    %v115 = vpop.f32.mrb[0].mxu0
    %116 = vdwg.mxu0
    %v117 = vrot.slane %v114, 4
    %v118 = vadd.f32 %v114, %v117
    %v119 = vrot.slane %v118, 2
    %v120 = vadd.f32 %v118, %v119
    %v121 = vrot.slane %v120, 1
    %v122 = vadd.f32 %v120, %v121
    %v123 = vrcp.pop 8.0
    %v124 = vmul.f32 %v122, %v123
    %v125 = vmul.f32 %v114, %v114
    %v126 = vrot.slane %v125, 4
    %v127 = vadd.f32 %v125, %v126
    %v128 = vrot.slane %v127, 2
    %v129 = vadd.f32 %v127, %v128
    %v130 = vrot.slane %v129, 1
    %v131 = vadd.f32 %v129, %v130
    %v132 = vmul.f32 %v131, %v123
    %v133 = vmul.f32 %v124, %v124
    %v134 = vsub.f32 %v132, %v133
    %v135 = vmax.f32 %v134, 0.0
    %v136 = vsub.f32 %v114, %v124
    %v137 = vadd.f32 %v135, 1e-05
    %v138 = vrsqrt.pop %v137
    %v139 = vmul.f32 %v136, %v138
    %v140 = vlaneseq
    %v141 = vand.u32 %v140, 127
    %vm142 = vcmp.lt.s32.totalorder %v141, 16
    %v143 = vmul.f32 %v139, 0.5
    %v144 = vmul.f32 %v143, 1.442695
    %v145 = vpow.pop %v144
    %v146 = vsel %vm142, %v139, %v145
    %147 = vst [vmem:[#allocation7] sm:$0xff] %v146
    // Predicated region
    $region18: #{tpu_custom_call.1} parent=1 // pred_check
      _
    $region19: #{tpu_custom_call.1} parent=1 // pred_check_branch
      %149 = sbr.rel (0) target = $region21
    $region20: #{tpu_custom_call.1} parent=1 // pred_region
      %s151 = ssub.s32 128, 128
      %152 = vsyncadd [#allocation4], %s151
      %s154 = sshll.u32 [#allocation7], 4
      %s155 = int_to_ptr.vmem [resolvable:$true] %s154
      %157 = dma.vmem_to_hbm [thread:$0]  %s155, 128, %s2, [#allocation4]
    $region21: #{tpu_custom_call.1} parent=1 // pred_fallthru
      _
    // Predicated region
    $region22: #{tpu_custom_call.1} parent=1 // pred_check
      _
    $region23: #{tpu_custom_call.1} parent=1 // pred_check_branch
      %159 = sbr.rel (0) target = $region25
    $region24: #{tpu_custom_call.1} parent=1 // pred_region
      %160 = dma.done [#allocation4], 128
    $region25: #{tpu_custom_call.1} parent=1 // pred_fallthru
      _
    %161 = vsyncpa [#allocation3], 1
    %162 = vsyncpa [#allocation6], 1
    %163 = vsyncpa [#allocation4], 1

</llo_original>
